<compile_context>
chip_gen: v5e
topology: v5e:2x2
jax: 0.10.0
libtpu: 0.0.40
codegen_flags: <defaults>
</compile_context>

<pallas_src>
import jax
import jax.numpy as jnp
from jax.experimental import pallas as pl
from jax.experimental.pallas import tpu as pltpu

NUM_HIDDEN = 6          # num_hidden_layers
H = 30                  # neurons_per_layer (logical)
H_PAD = 32              # padded feature dim (sublane-friendly)
IN_DIM = 2
OUT_DIM = 1
TM = 256                # batch points (lanes) per grid step


def mlp_kernel(x_ref, w_in_ref, b_in_ref, w_h_ref, b_h_ref, w_out_ref, b_out_ref, o_ref):
    # x_ref:     (IN_DIM, TM)          batch on lanes
    # w_in_ref:  (H_PAD, IN_DIM)       PyTorch (out, in) layout, zero-padded
    # b_in_ref:  (H_PAD, 1)
    # w_h_ref:   (NUM_HIDDEN, H_PAD, H_PAD)
    # b_h_ref:   (NUM_HIDDEN, H_PAD, 1)
    # w_out_ref: (1, H_PAD)
    # b_out_ref: (1, 1)
    # o_ref:     (1, TM)               lane-dense output row
    x = x_ref[...]
    w_in = w_in_ref[...]

    # Input layer (K=2): two VPU broadcast multiply-adds instead of a degenerate matmul.
    z = (w_in[:, 0:1] * x[0:1, :]
         + w_in[:, 1:2] * x[1:2, :]
         + b_in_ref[...])                                     # (H_PAD, TM)

    # Hidden layers: z <- W_l @ tanh(z) + b_l   (MXU free dim = TM lanes, tanh on EUP)
    for l in range(NUM_HIDDEN):
        z = jnp.dot(w_h_ref[l], jnp.tanh(z),
                    preferred_element_type=jnp.float32) + b_h_ref[l]

    # Output layer: (1, H_PAD) @ (H_PAD, TM) -> lane-dense (1, TM)
    out = jnp.dot(w_out_ref[...], z,
                  preferred_element_type=jnp.float32) + b_out_ref[...]
    o_ref[...] = out.astype(o_ref.dtype)


def displacement_net(x, params):
    """x: (N, 2) float32 -> (N, 1) float32. Handles ragged N via zero-padding."""
    w_in, b_in, w_h, b_h, w_out, b_out = params   # PyTorch (out, in) layouts
    N = x.shape[0]
    n_pad = ((N + TM - 1) // TM) * TM

    # --- wrapper-side layout/padding (pure data plumbing, zero numerical effect) ---
    xt = jnp.zeros((IN_DIM, n_pad), jnp.float32).at[:, :N].set(x.T)
    w_in_k = jnp.zeros((H_PAD, IN_DIM), jnp.float32).at[:H, :].set(w_in)
    b_in_k = jnp.zeros((H_PAD, 1), jnp.float32).at[:H, 0].set(b_in)
    w_h_k = jnp.zeros((NUM_HIDDEN, H_PAD, H_PAD), jnp.float32).at[:, :H, :H].set(w_h)
    b_h_k = jnp.zeros((NUM_HIDDEN, H_PAD, 1), jnp.float32).at[:, :H, 0].set(b_h)
    w_out_k = jnp.zeros((1, H_PAD), jnp.float32).at[:, :H].set(w_out)
    b_out_k = b_out.reshape(1, 1).astype(jnp.float32)

    grid = (n_pad // TM,)

    def full_spec(shape):
        nd = len(shape)
        return pl.BlockSpec(shape, lambda i, _nd=nd: (0,) * _nd)

    # Advisory cost hint: ~1 KFLOP per byte -> compute-bound custom call.
    weight_bytes = 4 * (H_PAD * IN_DIM + H_PAD + NUM_HIDDEN * H_PAD * H_PAD
                        + NUM_HIDDEN * H_PAD + H_PAD + 1)
    cost = pl.CostEstimate(
        flops=2 * n_pad * (IN_DIM * H + NUM_HIDDEN * H * H + H),
        transcendentals=NUM_HIDDEN * H * n_pad,
        bytes_accessed=4 * n_pad * (IN_DIM + OUT_DIM) + weight_bytes,
    )

    out = pl.pallas_call(
        mlp_kernel,
        out_shape=jax.ShapeDtypeStruct((1, n_pad), jnp.float32),
        grid_spec=pltpu.PrefetchScalarGridSpec(
            num_scalar_prefetch=0,
            grid=grid,
            in_specs=[
                pl.BlockSpec((IN_DIM, TM), lambda i: (0, i)),   # x tile (batch on lanes)
                full_spec((H_PAD, IN_DIM)),                     # w_in
                full_spec((H_PAD, 1)),                          # b_in
                full_spec((NUM_HIDDEN, H_PAD, H_PAD)),          # stacked hidden W
                full_spec((NUM_HIDDEN, H_PAD, 1)),              # stacked hidden b
                full_spec((1, H_PAD)),                          # w_out
                full_spec((1, 1)),                              # b_out
            ],
            out_specs=pl.BlockSpec((1, TM), lambda i: (0, i)),  # lane-dense output row
        ),
        compiler_params=pltpu.CompilerParams(
            dimension_semantics=("parallel",)),
        cost_estimate=cost,
    )(xt, w_in_k, b_in_k, w_h_k, b_h_k, w_out_k, b_out_k)

    return out[0, :N].reshape(N, OUT_DIM)


def init_params(key):
    """Deterministic synthetic parameters in PyTorch's (out_features, in_features) layout."""
    ks = jax.random.split(key, 6)
    w_in = jax.random.normal(ks[0], (H, IN_DIM), jnp.float32) * (1.0 / jnp.sqrt(IN_DIM))
    b_in = jax.random.normal(ks[1], (H,), jnp.float32) * 0.01
    w_h = jax.random.normal(ks[2], (NUM_HIDDEN, H, H), jnp.float32) * (1.0 / jnp.sqrt(H))
    b_h = jax.random.normal(ks[3], (NUM_HIDDEN, H), jnp.float32) * 0.01
    w_out = jax.random.normal(ks[4], (OUT_DIM, H), jnp.float32) * (1.0 / jnp.sqrt(H))
    b_out = jax.random.normal(ks[5], (OUT_DIM,), jnp.float32) * 0.01
    return (w_in, b_in, w_h, b_h, w_out, b_out)


def reference(x, params):
    """Pure-JAX reference of the PyTorch forward (x @ W.T + b semantics)."""
    w_in, b_in, w_h, b_h, w_out, b_out = params
    z = x @ w_in.T + b_in
    for l in range(NUM_HIDDEN):
        z = jnp.tanh(z) @ w_h[l].T + b_h[l]
    return z @ w_out.T + b_out


if __name__ == "__main__":
    key = jax.random.PRNGKey(0)
    kp, kx = jax.random.split(key)
    params = init_params(kp)

    N = 500  # number of (x, y) query points (ragged: not a multiple of TM)
    x = jax.random.normal(kx, (N, IN_DIM), jnp.float32)

    out = displacement_net(x, params)
    out = jax.block_until_ready(out)

    ref = reference(x, params)
    assert out.shape == (N, OUT_DIM)
    assert jnp.allclose(out, ref, atol=1e-4, rtol=1e-4), "mismatch vs reference"

    print("KERNEL_OK")
</pallas_src>

<mosaic_0001>
module attributes {stable_mosaic.version = 11 : i64} {
  func.func @mlp_kernel(%arg0: i32, %arg1: memref<2x256xf32, #tpu.memory_space<vmem>>, %arg2: memref<32x2xf32, #tpu.memory_space<vmem>>, %arg3: memref<32x1xf32, #tpu.memory_space<vmem>>, %arg4: memref<6x32x32xf32, #tpu.memory_space<vmem>>, %arg5: memref<6x32x1xf32, #tpu.memory_space<vmem>>, %arg6: memref<1x32xf32, #tpu.memory_space<vmem>>, %arg7: memref<1x1xf32, #tpu.memory_space<vmem>>, %arg8: memref<1x256xf32, #tpu.memory_space<vmem>>) attributes {dimension_semantics = [#tpu.dimension_semantics<parallel>], iteration_bounds = array<i64: 2>, scalar_prefetch = 0 : i64, scratch_operands = 0 : i64, tpu.core_type = #tpu.core_type<tc>, window_params = [{transform_indices = @transform_0, window_bounds = array<i64: 2, 256>}, {pipeline_mode = #tpu.pipeline_mode<synchronous>, transform_indices = @transform_1, window_bounds = array<i64: 32, 2>}, {pipeline_mode = #tpu.pipeline_mode<synchronous>, transform_indices = @transform_2, window_bounds = array<i64: 32, 1>}, {pipeline_mode = #tpu.pipeline_mode<synchronous>, transform_indices = @transform_3, window_bounds = array<i64: 6, 32, 32>}, {pipeline_mode = #tpu.pipeline_mode<synchronous>, transform_indices = @transform_4, window_bounds = array<i64: 6, 32, 1>}, {pipeline_mode = #tpu.pipeline_mode<synchronous>, transform_indices = @transform_5, window_bounds = array<i64: 1, 32>}, {pipeline_mode = #tpu.pipeline_mode<synchronous>, transform_indices = @transform_6, window_bounds = array<i64: 1, 1>}, {transform_indices = @transform_7, window_bounds = array<i64: 1, 256>}]} {
    %c0 = arith.constant 0 : index
    %c0_0 = arith.constant 0 : index
    %0 = vector.load %arg1[%c0, %c0_0] : memref<2x256xf32, #tpu.memory_space<vmem>>, vector<2x256xf32>
    %c0_1 = arith.constant 0 : index
    %c0_2 = arith.constant 0 : index
    %1 = vector.load %arg2[%c0_1, %c0_2] : memref<32x2xf32, #tpu.memory_space<vmem>>, vector<32x2xf32>
    %2 = vector.extract_strided_slice %1 {offsets = [0, 0], sizes = [32, 1], strides = [1, 1]} : vector<32x2xf32> to vector<32x1xf32>
    %3 = vector.extract_strided_slice %0 {offsets = [0, 0], sizes = [1, 256], strides = [1, 1]} : vector<2x256xf32> to vector<1x256xf32>
    %4 = vector.broadcast %2 : vector<32x1xf32> to vector<32x256xf32>
    %5 = vector.broadcast %3 : vector<1x256xf32> to vector<32x256xf32>
    %6 = arith.mulf %4, %5 : vector<32x256xf32>
    %7 = vector.extract_strided_slice %1 {offsets = [0, 1], sizes = [32, 1], strides = [1, 1]} : vector<32x2xf32> to vector<32x1xf32>
    %8 = vector.extract_strided_slice %0 {offsets = [1, 0], sizes = [1, 256], strides = [1, 1]} : vector<2x256xf32> to vector<1x256xf32>
    %9 = vector.broadcast %7 : vector<32x1xf32> to vector<32x256xf32>
    %10 = vector.broadcast %8 : vector<1x256xf32> to vector<32x256xf32>
    %11 = arith.mulf %9, %10 : vector<32x256xf32>
    %12 = arith.addf %6, %11 : vector<32x256xf32>
    %c0_3 = arith.constant 0 : index
    %c0_4 = arith.constant 0 : index
    %13 = vector.load %arg3[%c0_3, %c0_4] : memref<32x1xf32, #tpu.memory_space<vmem>>, vector<32x1xf32>
    %14 = vector.broadcast %13 : vector<32x1xf32> to vector<32x256xf32>
    %15 = arith.addf %12, %14 : vector<32x256xf32>
    %c0_5 = arith.constant 0 : index
    %c0_6 = arith.constant 0 : index
    %c0_7 = arith.constant 0 : index
    %16 = vector.load %arg4[%c0_5, %c0_6, %c0_7] : memref<6x32x32xf32, #tpu.memory_space<vmem>>, vector<1x32x32xf32>
    %17 = vector.shape_cast %16 : vector<1x32x32xf32> to vector<32x32xf32>
    %18 = math.tanh %15 : vector<32x256xf32>
    %cst = arith.constant dense<0.000000e+00> : vector<32x256xf32>
    %19 = tpu.matmul %17, %18, %cst {dimension_numbers = #tpu.dot_dimension_numbers<[1], [0], [0], [1], [0, 0, 1, 1], [], []>} : vector<32x32xf32>, vector<32x256xf32>, vector<32x256xf32> -> vector<32x256xf32>
    %c0_8 = arith.constant 0 : index
    %c0_9 = arith.constant 0 : index
    %c0_10 = arith.constant 0 : index
    %20 = vector.load %arg5[%c0_8, %c0_9, %c0_10] : memref<6x32x1xf32, #tpu.memory_space<vmem>>, vector<1x32x1xf32>
    %21 = vector.shape_cast %20 : vector<1x32x1xf32> to vector<32x1xf32>
    %22 = vector.broadcast %21 : vector<32x1xf32> to vector<32x256xf32>
    %23 = arith.addf %19, %22 : vector<32x256xf32>
    %c1 = arith.constant 1 : index
    %c0_11 = arith.constant 0 : index
    %c0_12 = arith.constant 0 : index
    %24 = vector.load %arg4[%c1, %c0_11, %c0_12] : memref<6x32x32xf32, #tpu.memory_space<vmem>>, vector<1x32x32xf32>
    %25 = vector.shape_cast %24 : vector<1x32x32xf32> to vector<32x32xf32>
    %26 = math.tanh %23 : vector<32x256xf32>
    %cst_13 = arith.constant dense<0.000000e+00> : vector<32x256xf32>
    %27 = tpu.matmul %25, %26, %cst_13 {dimension_numbers = #tpu.dot_dimension_numbers<[1], [0], [0], [1], [0, 0, 1, 1], [], []>} : vector<32x32xf32>, vector<32x256xf32>, vector<32x256xf32> -> vector<32x256xf32>
    %c1_14 = arith.constant 1 : index
    %c0_15 = arith.constant 0 : index
    %c0_16 = arith.constant 0 : index
    %28 = vector.load %arg5[%c1_14, %c0_15, %c0_16] : memref<6x32x1xf32, #tpu.memory_space<vmem>>, vector<1x32x1xf32>
    %29 = vector.shape_cast %28 : vector<1x32x1xf32> to vector<32x1xf32>
    %30 = vector.broadcast %29 : vector<32x1xf32> to vector<32x256xf32>
    %31 = arith.addf %27, %30 : vector<32x256xf32>
    %c2 = arith.constant 2 : index
    %c0_17 = arith.constant 0 : index
    %c0_18 = arith.constant 0 : index
    %32 = vector.load %arg4[%c2, %c0_17, %c0_18] : memref<6x32x32xf32, #tpu.memory_space<vmem>>, vector<1x32x32xf32>
    %33 = vector.shape_cast %32 : vector<1x32x32xf32> to vector<32x32xf32>
    %34 = math.tanh %31 : vector<32x256xf32>
    %cst_19 = arith.constant dense<0.000000e+00> : vector<32x256xf32>
    %35 = tpu.matmul %33, %34, %cst_19 {dimension_numbers = #tpu.dot_dimension_numbers<[1], [0], [0], [1], [0, 0, 1, 1], [], []>} : vector<32x32xf32>, vector<32x256xf32>, vector<32x256xf32> -> vector<32x256xf32>
    %c2_20 = arith.constant 2 : index
    %c0_21 = arith.constant 0 : index
    %c0_22 = arith.constant 0 : index
    %36 = vector.load %arg5[%c2_20, %c0_21, %c0_22] : memref<6x32x1xf32, #tpu.memory_space<vmem>>, vector<1x32x1xf32>
    %37 = vector.shape_cast %36 : vector<1x32x1xf32> to vector<32x1xf32>
    %38 = vector.broadcast %37 : vector<32x1xf32> to vector<32x256xf32>
    %39 = arith.addf %35, %38 : vector<32x256xf32>
    %c3 = arith.constant 3 : index
    %c0_23 = arith.constant 0 : index
    %c0_24 = arith.constant 0 : index
    %40 = vector.load %arg4[%c3, %c0_23, %c0_24] : memref<6x32x32xf32, #tpu.memory_space<vmem>>, vector<1x32x32xf32>
    %41 = vector.shape_cast %40 : vector<1x32x32xf32> to vector<32x32xf32>
    %42 = math.tanh %39 : vector<32x256xf32>
    %cst_25 = arith.constant dense<0.000000e+00> : vector<32x256xf32>
    %43 = tpu.matmul %41, %42, %cst_25 {dimension_numbers = #tpu.dot_dimension_numbers<[1], [0], [0], [1], [0, 0, 1, 1], [], []>} : vector<32x32xf32>, vector<32x256xf32>, vector<32x256xf32> -> vector<32x256xf32>
    %c3_26 = arith.constant 3 : index
    %c0_27 = arith.constant 0 : index
    %c0_28 = arith.constant 0 : index
    %44 = vector.load %arg5[%c3_26, %c0_27, %c0_28] : memref<6x32x1xf32, #tpu.memory_space<vmem>>, vector<1x32x1xf32>
    %45 = vector.shape_cast %44 : vector<1x32x1xf32> to vector<32x1xf32>
    %46 = vector.broadcast %45 : vector<32x1xf32> to vector<32x256xf32>
    %47 = arith.addf %43, %46 : vector<32x256xf32>
    %c4 = arith.constant 4 : index
    %c0_29 = arith.constant 0 : index
    %c0_30 = arith.constant 0 : index
    %48 = vector.load %arg4[%c4, %c0_29, %c0_30] : memref<6x32x32xf32, #tpu.memory_space<vmem>>, vector<1x32x32xf32>
    %49 = vector.shape_cast %48 : vector<1x32x32xf32> to vector<32x32xf32>
    %50 = math.tanh %47 : vector<32x256xf32>
    %cst_31 = arith.constant dense<0.000000e+00> : vector<32x256xf32>
    %51 = tpu.matmul %49, %50, %cst_31 {dimension_numbers = #tpu.dot_dimension_numbers<[1], [0], [0], [1], [0, 0, 1, 1], [], []>} : vector<32x32xf32>, vector<32x256xf32>, vector<32x256xf32> -> vector<32x256xf32>
    %c4_32 = arith.constant 4 : index
    %c0_33 = arith.constant 0 : index
    %c0_34 = arith.constant 0 : index
    %52 = vector.load %arg5[%c4_32, %c0_33, %c0_34] : memref<6x32x1xf32, #tpu.memory_space<vmem>>, vector<1x32x1xf32>
    %53 = vector.shape_cast %52 : vector<1x32x1xf32> to vector<32x1xf32>
    %54 = vector.broadcast %53 : vector<32x1xf32> to vector<32x256xf32>
    %55 = arith.addf %51, %54 : vector<32x256xf32>
    %c5 = arith.constant 5 : index
    %c0_35 = arith.constant 0 : index
    %c0_36 = arith.constant 0 : index
    %56 = vector.load %arg4[%c5, %c0_35, %c0_36] : memref<6x32x32xf32, #tpu.memory_space<vmem>>, vector<1x32x32xf32>
    %57 = vector.shape_cast %56 : vector<1x32x32xf32> to vector<32x32xf32>
    %58 = math.tanh %55 : vector<32x256xf32>
    %cst_37 = arith.constant dense<0.000000e+00> : vector<32x256xf32>
    %59 = tpu.matmul %57, %58, %cst_37 {dimension_numbers = #tpu.dot_dimension_numbers<[1], [0], [0], [1], [0, 0, 1, 1], [], []>} : vector<32x32xf32>, vector<32x256xf32>, vector<32x256xf32> -> vector<32x256xf32>
    %c5_38 = arith.constant 5 : index
    %c0_39 = arith.constant 0 : index
    %c0_40 = arith.constant 0 : index
    %60 = vector.load %arg5[%c5_38, %c0_39, %c0_40] : memref<6x32x1xf32, #tpu.memory_space<vmem>>, vector<1x32x1xf32>
    %61 = vector.shape_cast %60 : vector<1x32x1xf32> to vector<32x1xf32>
    %62 = vector.broadcast %61 : vector<32x1xf32> to vector<32x256xf32>
    %63 = arith.addf %59, %62 : vector<32x256xf32>
    %c0_41 = arith.constant 0 : index
    %c0_42 = arith.constant 0 : index
    %64 = vector.load %arg6[%c0_41, %c0_42] : memref<1x32xf32, #tpu.memory_space<vmem>>, vector<1x32xf32>
    %cst_43 = arith.constant dense<0.000000e+00> : vector<1x256xf32>
    %65 = tpu.matmul %64, %63, %cst_43 {dimension_numbers = #tpu.dot_dimension_numbers<[1], [0], [0], [1], [0, 0, 1, 1], [], []>} : vector<1x32xf32>, vector<32x256xf32>, vector<1x256xf32> -> vector<1x256xf32>
    %c0_44 = arith.constant 0 : index
    %c0_45 = arith.constant 0 : index
    %66 = vector.load %arg7[%c0_44, %c0_45] : memref<1x1xf32, #tpu.memory_space<vmem>>, vector<1x1xf32>
    %67 = vector.broadcast %66 : vector<1x1xf32> to vector<1x256xf32>
    %68 = arith.addf %65, %67 : vector<1x256xf32>
    %c0_46 = arith.constant 0 : index
    %c0_47 = arith.constant 0 : index
    %69 = vector.load %arg8[%c0_46, %c0_47] : memref<1x256xf32, #tpu.memory_space<vmem>>, vector<1x256xf32>
    tpu.vector_store %arg8[%c0_46, %c0_47], %68 {strides = array<i32>} : memref<1x256xf32, #tpu.memory_space<vmem>>, vector<1x256xf32>,
    return
  }
  func.func @transform_0(%arg0: i32) -> (i32, i32) {
    %c0_i32 = arith.constant 0 : i32
    %c0_i32_0 = arith.constant 0 : i32
    return %c0_i32, %arg0 : i32, i32
  }
  func.func @transform_1(%arg0: i32) -> (i32, i32) {
    %c0_i32 = arith.constant 0 : i32
    %c0_i32_0 = arith.constant 0 : i32
    %c0_i32_1 = arith.constant 0 : i32
    return %c0_i32, %c0_i32_0 : i32, i32
  }
  func.func @transform_2(%arg0: i32) -> (i32, i32) {
    %c0_i32 = arith.constant 0 : i32
    %c0_i32_0 = arith.constant 0 : i32
    %c0_i32_1 = arith.constant 0 : i32
    return %c0_i32, %c0_i32_0 : i32, i32
  }
  func.func @transform_3(%arg0: i32) -> (i32, i32, i32) {
    %c0_i32 = arith.constant 0 : i32
    %c0_i32_0 = arith.constant 0 : i32
    %c0_i32_1 = arith.constant 0 : i32
    %c0_i32_2 = arith.constant 0 : i32
    return %c0_i32, %c0_i32_0, %c0_i32_1 : i32, i32, i32
  }
  func.func @transform_4(%arg0: i32) -> (i32, i32, i32) {
    %c0_i32 = arith.constant 0 : i32
    %c0_i32_0 = arith.constant 0 : i32
    %c0_i32_1 = arith.constant 0 : i32
    %c0_i32_2 = arith.constant 0 : i32
    return %c0_i32, %c0_i32_0, %c0_i32_1 : i32, i32, i32
  }
  func.func @transform_5(%arg0: i32) -> (i32, i32) {
    %c0_i32 = arith.constant 0 : i32
    %c0_i32_0 = arith.constant 0 : i32
    %c0_i32_1 = arith.constant 0 : i32
    return %c0_i32, %c0_i32_0 : i32, i32
  }
  func.func @transform_6(%arg0: i32) -> (i32, i32) {
    %c0_i32 = arith.constant 0 : i32
    %c0_i32_0 = arith.constant 0 : i32
    %c0_i32_1 = arith.constant 0 : i32
    return %c0_i32, %c0_i32_0 : i32, i32
  }
  func.func @transform_7(%arg0: i32) -> (i32, i32) {
    %c0_i32 = arith.constant 0 : i32
    %c0_i32_0 = arith.constant 0 : i32
    return %c0_i32, %arg0 : i32, i32
  }
}

</mosaic_0001>

<llo_original>
// kernel: tpu_custom_call.1
$region0: #{tpu_custom_call.1}
  #allocation0 [shape = 'u32[]', space=smem, size = 0x4, offset = 0x4, fixed_abs, tag = 'smem constant byte address 0x4 - core index']
  #allocation1 [shape = 'u32[72,128]{1,0:T(1,128)}', space=vmem, size = 0x9000, scoped, tag = 'internal scratch']
  #allocation2 [shape = 'f32[1,1]{1,0:T(1,128)S(1)}', space=vmem, size = 0x200, scoped, tag = 'scoped memory for tpu_custom_call.1']
  %s0 = inlined_call_operand.vmem [shape: f32[2,512], index: 0, kind: input, shape index: {}]
  %s1 = inlined_call_operand.vmem [shape: f32[32,2], index: 1, kind: input, shape index: {}]
  %s2 = inlined_call_operand.vmem [shape: f32[32,1], index: 2, kind: input, shape index: {}]
  %s3 = inlined_call_operand.vmem [shape: f32[6,32,32], index: 3, kind: input, shape index: {}]
  %s4 = inlined_call_operand.vmem [shape: f32[6,32,1], index: 4, kind: input, shape index: {}]
  %s5 = inlined_call_operand.vmem [shape: f32[1,32], index: 5, kind: input, shape index: {}]
  %s6 = inlined_call_operand.<no memory space> [shape: f32[1,1], index: 6, kind: input, shape index: {}]
  %s7 = inlined_call_operand.hbm [shape: f32[1,512], index: 7, kind: output, shape index: {}]
  %s8 = sld [smem:[#allocation0]]
  $region61: #{tpu_custom_call.1} parent=0
    _
  %s10 = ssub.s32 1, %s8
  %s11 = scalar_select 0, %s10, %s8
  %v12 = vstv %s6
  %13 = vst [vmem:[#allocation2] sm:$0x1] %v12
  $region1: #{tpu_custom_call.1} parent=0
    #allocation3 [shape = 'u8[2048]{0}', space=vmem, size = 0x800, scoped, tag = 'output window, operand 0']
    #allocation4 [shape = 's32[2]{0}', space=sflag, size = 0x8, scoped, tag = 'scoped memory for tpu_custom_call.1']
    %14 = vsyncpa [#allocation4], 0
    %s15 = scalar_lea.sflag [#allocation4], 1
    %16 = vsyncpa %s15, 0
    loop: start=0, step=1, limit=4
    $region2: #{tpu_custom_call.1} parent=1 // loop_pre_header
      _
    $region3: #{tpu_custom_call.1} parent=1 // loop_header
      %s18 = sphi 0, %s22
      %p19 = scmp.ge.s32.totalorder %s18, 4
      %s28 = sphi 0, %s30
      %s31 = sphi 0, %s28
      %s32 = sphi 0, %s31
      %s48 = sphi 0, %s32
      %s52 = sphi 0, %s52
      %s54 = sphi 0, %s52
      %s55 = sphi 0, %s54
      %s69 = sphi 0, %s55
      %s73 = sphi 0, %s73
      %s75 = sphi 0, %s73
      %s76 = sphi 0, %s75
      %s90 = sphi 0, %s76
      %s94 = sphi 0, %s94
      %s96 = sphi 0, %s94
      %s97 = sphi 0, %s96
      %s111 = sphi 0, %s97
      %s115 = sphi 0, %s115
      %s117 = sphi 0, %s115
      %s118 = sphi 0, %s117
      %s132 = sphi 0, %s118
      %s136 = sphi 0, %s136
      %s138 = sphi 0, %s136
      %s139 = sphi 0, %s138
      %s153 = sphi 0, %s139
      %s157 = sphi 0, %s157
      %s159 = sphi 0, %s157
      %s160 = sphi 0, %s159
      %s174 = sphi 0, %s160
      %s180 = sphi 0, %s182
      %s183 = sphi 0, %s180
      %s184 = sphi 0, %s183
      %s200 = sphi 0, %s184
    $region4: #{tpu_custom_call.1} parent=1 // loop_header_branch
      %21 = sbr.rel (%p19) target = $region8
    $region5: #{tpu_custom_call.1} parent=1 // loop_body
      %s23 = ssub.s32 %s18, 1
      %s24 = ssub.s32 %s18, 2
      %s25 = sadd.s32 %s18, 1
      %s26 = ssub.s32 %s18, %s25
      %p27 = scmp.eq.s32.totalorder %s26, 0
      %s29 = sadd.s32 %s28, 1
      %s30 = scalar_select %p27, %s28, %s29
      %p33 = pneg %p27
      %p34 = scmp.eq.s32.totalorder %s18, 1
      %p35 = por %p33, %p34
      %p36 = scmp.ne.s32.totalorder %s28, %s31
      %p37 = scmp.eq.s32.totalorder %s18, 0
      %p38 = por %p36, %p37
      %p39 = scmp.ne.s32.totalorder %s28, %s31
      %p40 = scmp.eq.s32.totalorder %s23, 1
      %p41 = por %p39, %p40
      %p42 = scmp.ne.s32.totalorder %s31, %s32
      %p43 = scmp.eq.s32.totalorder %s23, 0
      %p44 = por %p42, %p43
      %p45 = scmp.ne.s32.totalorder %s31, %s32
      %p46 = scmp.eq.s32.totalorder %s24, 1
      %p47 = por %p45, %p46
      %p49 = scmp.ne.s32.totalorder %s32, %s48
      %p50 = scmp.eq.s32.totalorder %s24, 0
      %p51 = por %p49, %p50
      %s53 = sadd.s32 %s52, 1
      %p56 = scmp.eq.s32.totalorder %s18, 1
      %p57 = scmp.ne.s32.totalorder %s52, %s54
      %p58 = scmp.eq.s32.totalorder %s18, 0
      %p59 = por %p57, %p58
      %p60 = scmp.ne.s32.totalorder %s52, %s54
      %p61 = scmp.eq.s32.totalorder %s23, 1
      %p62 = por %p60, %p61
      %p63 = scmp.ne.s32.totalorder %s54, %s55
      %p64 = scmp.eq.s32.totalorder %s23, 0
      %p65 = por %p63, %p64
      %p66 = scmp.ne.s32.totalorder %s54, %s55
      %p67 = scmp.eq.s32.totalorder %s24, 1
      %p68 = por %p66, %p67
      %p70 = scmp.ne.s32.totalorder %s55, %s69
      %p71 = scmp.eq.s32.totalorder %s24, 0
      %p72 = por %p70, %p71
      %s74 = sadd.s32 %s73, 1
      %p77 = scmp.eq.s32.totalorder %s18, 1
      %p78 = scmp.ne.s32.totalorder %s73, %s75
      %p79 = scmp.eq.s32.totalorder %s18, 0
      %p80 = por %p78, %p79
      %p81 = scmp.ne.s32.totalorder %s73, %s75
      %p82 = scmp.eq.s32.totalorder %s23, 1
      %p83 = por %p81, %p82
      %p84 = scmp.ne.s32.totalorder %s75, %s76
      %p85 = scmp.eq.s32.totalorder %s23, 0
      %p86 = por %p84, %p85
      %p87 = scmp.ne.s32.totalorder %s75, %s76
      %p88 = scmp.eq.s32.totalorder %s24, 1
      %p89 = por %p87, %p88
      %p91 = scmp.ne.s32.totalorder %s76, %s90
      %p92 = scmp.eq.s32.totalorder %s24, 0
      %p93 = por %p91, %p92
      %s95 = sadd.s32 %s94, 1
      %p98 = scmp.eq.s32.totalorder %s18, 1
      %p99 = scmp.ne.s32.totalorder %s94, %s96
      %p100 = scmp.eq.s32.totalorder %s18, 0
      %p101 = por %p99, %p100
      %p102 = scmp.ne.s32.totalorder %s94, %s96
      %p103 = scmp.eq.s32.totalorder %s23, 1
      %p104 = por %p102, %p103
      %p105 = scmp.ne.s32.totalorder %s96, %s97
      %p106 = scmp.eq.s32.totalorder %s23, 0
      %p107 = por %p105, %p106
      %p108 = scmp.ne.s32.totalorder %s96, %s97
      %p109 = scmp.eq.s32.totalorder %s24, 1
      %p110 = por %p108, %p109
      %p112 = scmp.ne.s32.totalorder %s97, %s111
      %p113 = scmp.eq.s32.totalorder %s24, 0
      %p114 = por %p112, %p113
      %s116 = sadd.s32 %s115, 1
      %p119 = scmp.eq.s32.totalorder %s18, 1
      %p120 = scmp.ne.s32.totalorder %s115, %s117
      %p121 = scmp.eq.s32.totalorder %s18, 0
      %p122 = por %p120, %p121
      %p123 = scmp.ne.s32.totalorder %s115, %s117
      %p124 = scmp.eq.s32.totalorder %s23, 1
      %p125 = por %p123, %p124
      %p126 = scmp.ne.s32.totalorder %s117, %s118
      %p127 = scmp.eq.s32.totalorder %s23, 0
      %p128 = por %p126, %p127
      %p129 = scmp.ne.s32.totalorder %s117, %s118
      %p130 = scmp.eq.s32.totalorder %s24, 1
      %p131 = por %p129, %p130
      %p133 = scmp.ne.s32.totalorder %s118, %s132
      %p134 = scmp.eq.s32.totalorder %s24, 0
      %p135 = por %p133, %p134
      %s137 = sadd.s32 %s136, 1
      %p140 = scmp.eq.s32.totalorder %s18, 1
      %p141 = scmp.ne.s32.totalorder %s136, %s138
      %p142 = scmp.eq.s32.totalorder %s18, 0
      %p143 = por %p141, %p142
      %p144 = scmp.ne.s32.totalorder %s136, %s138
      %p145 = scmp.eq.s32.totalorder %s23, 1
      %p146 = por %p144, %p145
      %p147 = scmp.ne.s32.totalorder %s138, %s139
      %p148 = scmp.eq.s32.totalorder %s23, 0
      %p149 = por %p147, %p148
      %p150 = scmp.ne.s32.totalorder %s138, %s139
      %p151 = scmp.eq.s32.totalorder %s24, 1
      %p152 = por %p150, %p151
      %p154 = scmp.ne.s32.totalorder %s139, %s153
      %p155 = scmp.eq.s32.totalorder %s24, 0
      %p156 = por %p154, %p155
      %s158 = sadd.s32 %s157, 1
      %p161 = scmp.eq.s32.totalorder %s18, 1
      %p162 = scmp.ne.s32.totalorder %s157, %s159
      %p163 = scmp.eq.s32.totalorder %s18, 0
      %p164 = por %p162, %p163
      %p165 = scmp.ne.s32.totalorder %s157, %s159
      %p166 = scmp.eq.s32.totalorder %s23, 1
      %p167 = por %p165, %p166
      %p168 = scmp.ne.s32.totalorder %s159, %s160
      %p169 = scmp.eq.s32.totalorder %s23, 0
      %p170 = por %p168, %p169
      %p171 = scmp.ne.s32.totalorder %s159, %s160
      %p172 = scmp.eq.s32.totalorder %s24, 1
      %p173 = por %p171, %p172
      %p175 = scmp.ne.s32.totalorder %s160, %s174
      %p176 = scmp.eq.s32.totalorder %s24, 0
      %p177 = por %p175, %p176
      %s178 = ssub.s32 %s18, %s25
      %p179 = scmp.eq.s32.totalorder %s178, 0
      %s181 = sadd.s32 %s180, 1
      %s182 = scalar_select %p179, %s180, %s181
      %p185 = pneg %p179
      %p186 = scmp.eq.s32.totalorder %s18, 1
      %p187 = por %p185, %p186
      %p188 = scmp.ne.s32.totalorder %s180, %s183
      %p189 = scmp.eq.s32.totalorder %s18, 0
      %p190 = por %p188, %p189
      %p191 = scmp.ne.s32.totalorder %s180, %s183
      %p192 = scmp.eq.s32.totalorder %s23, 1
      %p193 = por %p191, %p192
      %p194 = scmp.ne.s32.totalorder %s183, %s184
      %p195 = scmp.eq.s32.totalorder %s23, 0
      %p196 = por %p194, %p195
      %p197 = scmp.ne.s32.totalorder %s183, %s184
      %p198 = scmp.eq.s32.totalorder %s24, 1
      %p199 = por %p197, %p198
      %p201 = scmp.ne.s32.totalorder %s184, %s200
      %p202 = scmp.eq.s32.totalorder %s24, 0
      %p203 = por %p201, %p202
      %p204 = scmp.le.s32.totalorder 1, %s18
      %p205 = scmp.lt.s32.totalorder %s18, 3
      %p206 = pnand %p204, %p205
      %p207 = pneg %p206
      // Predicated region
      $region9: #{tpu_custom_call.1} parent=5 // pred_check
        _
      $region10: #{tpu_custom_call.1} parent=5 // pred_check_branch
        %209 = sbr.rel (%p206) target = $region12
      $region11: #{tpu_custom_call.1} parent=5 // pred_region
        %s210 = ssub.s32 %s18, 1
        // Predicated region
        $region13: #{tpu_custom_call.1} parent=11 // pred_check
          %p211 = pneg %p65
        $region14: #{tpu_custom_call.1} parent=11 // pred_check_branch
          %213 = sbr.rel (%p211) target = $region16
        $region15: #{tpu_custom_call.1} parent=11 // pred_region
          _
        $region16: #{tpu_custom_call.1} parent=11 // pred_fallthru
          _
        // Predicated region
        $region17: #{tpu_custom_call.1} parent=11 // pred_check
          %p214 = pneg %p86
        $region18: #{tpu_custom_call.1} parent=11 // pred_check_branch
          %216 = sbr.rel (%p214) target = $region20
        $region19: #{tpu_custom_call.1} parent=11 // pred_region
          _
        $region20: #{tpu_custom_call.1} parent=11 // pred_fallthru
          _
        // Predicated region
        $region21: #{tpu_custom_call.1} parent=11 // pred_check
          %p217 = pneg %p107
        $region22: #{tpu_custom_call.1} parent=11 // pred_check_branch
          %219 = sbr.rel (%p217) target = $region24
        $region23: #{tpu_custom_call.1} parent=11 // pred_region
          _
        $region24: #{tpu_custom_call.1} parent=11 // pred_fallthru
          _
        // Predicated region
        $region25: #{tpu_custom_call.1} parent=11 // pred_check
          %p220 = pneg %p128
        $region26: #{tpu_custom_call.1} parent=11 // pred_check_branch
          %222 = sbr.rel (%p220) target = $region28
        $region27: #{tpu_custom_call.1} parent=11 // pred_region
          _
        $region28: #{tpu_custom_call.1} parent=11 // pred_fallthru
          _
        // Predicated region
        $region29: #{tpu_custom_call.1} parent=11 // pred_check
          %p223 = pneg %p149
        $region30: #{tpu_custom_call.1} parent=11 // pred_check_branch
          %225 = sbr.rel (%p223) target = $region32
        $region31: #{tpu_custom_call.1} parent=11 // pred_region
          _
        $region32: #{tpu_custom_call.1} parent=11 // pred_fallthru
          _
        // Predicated region
        $region33: #{tpu_custom_call.1} parent=11 // pred_check
          %p226 = pneg %p170
        $region34: #{tpu_custom_call.1} parent=11 // pred_check_branch
          %228 = sbr.rel (%p226) target = $region36
        $region35: #{tpu_custom_call.1} parent=11 // pred_region
          _
        $region36: #{tpu_custom_call.1} parent=11 // pred_fallthru
          _
      $region12: #{tpu_custom_call.1} parent=5 // pred_fallthru
        _
      %p229 = scmp.lt.s32.totalorder %s18, 2
      // Predicated region
      $region37: #{tpu_custom_call.1} parent=5 // pred_check
        %p230 = pneg %p229
      $region38: #{tpu_custom_call.1} parent=5 // pred_check_branch
        %232 = sbr.rel (%p230) target = $region40
      $region39: #{tpu_custom_call.1} parent=5 // pred_region
        // Predicated region
        $region41: #{tpu_custom_call.1} parent=39 // pred_check
          %p233 = pneg %p38
        $region42: #{tpu_custom_call.1} parent=39 // pred_check_branch
          %235 = sbr.rel (%p233) target = $region44
        $region43: #{tpu_custom_call.1} parent=39 // pred_region
          %s236 = smul.u32 2, %s18
          %p237 = scmp.lt.s32.totalorder %s236, 3
          %s238 = scalar_select %p237, %s236, 3
          %s239 = smul.addr %s238, 2
          %s240 = scalar_lea.vmem %s0, %s239
          %s241 = smul.u32 2, %s18
        $region44: #{tpu_custom_call.1} parent=39 // pred_fallthru
          _
      $region40: #{tpu_custom_call.1} parent=5 // pred_fallthru
        _
      %p242 = scmp.le.s32.totalorder 1, %s18
      %p243 = scmp.lt.s32.totalorder %s18, 3
      %p244 = pnand %p242, %p243
      %p245 = pneg %p244
      // Predicated region
      $region45: #{tpu_custom_call.1} parent=5 // pred_check
        _
      $region46: #{tpu_custom_call.1} parent=5 // pred_check_branch
        %247 = sbr.rel (%p244) target = $region48
      $region47: #{tpu_custom_call.1} parent=5 // pred_region
        %s248 = ssub.s32 %s18, 1
        %s249 = smul.u32 2, %s23
        %p250 = scmp.lt.s32.totalorder %s249, 3
        %s251 = scalar_select %p250, %s249, 3
        %s252 = smul.addr %s251, 2
        %s253 = scalar_lea.vmem %s0, %s252
        %p254 = pneg %p44
        %p255 = pneg %p41
        %p256 = pneg %p65
        %p257 = pneg %p62
        %p258 = pneg %p86
        %p259 = pneg %p83
        %p260 = pneg %p107
        %p261 = pneg %p104
        %p262 = pneg %p128
        %p263 = pneg %p125
        %p264 = pneg %p149
        %p265 = pneg %p146
        %p266 = pneg %p170
        %p267 = pneg %p167
        %p268 = pneg %p196
        %p269 = pneg %p193
        %s270 = sand.u32 %s183, 1
        %s271 = scalar_lea.sflag [#allocation4], %s270
        %s272 = sand.u32 %s183, 1
        %s273 = smul.addr %s272, 2
        %s274 = scalar_lea.vmem [#allocation3], %s273
        %s275 = smul.u32 2, %s23
        %p276 = scmp.lt.s32.totalorder %s275, 3
        %s277 = scalar_select %p276, %s275, 3
        %s278 = smul.addr %s277, 2
        %s279 = scalar_lea.vmem %s0, %s278
        %s280 = smul.u32 2, %s23
        %s281 = smul.u32 2, %s23
        %v282 = vld [vmem:[%s279] sm:$0xf]
        %v283 = vld [vmem:[%s1] sm:$0xff]
        %v284 = vld [vmem:[%s1 + $0x8] sm:$0xff]
        %v285 = vld [vmem:[%s1 + $0x10] sm:$0xff]
        %v286 = vld [vmem:[%s1 + $0x18] sm:$0xff]
        %288 = vset.pattern.permute.xlu0 0
        %289 = vperm.xlu0 %288, %v283
        %v290 = vpop.permute.xlu0 %289
        %293 = vset.pattern.permute.xlu0 0
        %294 = vperm.xlu0 %293, %v284
        %v295 = vpop.permute.xlu0 %294
        %298 = vset.pattern.permute.xlu0 0
        %299 = vperm.xlu0 %298, %v285
        %v300 = vpop.permute.xlu0 %299
        %303 = vset.pattern.permute.xlu0 0
        %304 = vperm.xlu0 %303, %v286
        %v305 = vpop.permute.xlu0 %304
        %v308 = vperm.slane %v282, 0
        %v309 = vperm.slane %v282, 2
        %v312 = vperm.slane %v308, 0
        %v313 = vperm.slane %v309, 0
        %v314 = vmul.f32 %v290, %v312
        %v315 = vmul.f32 %v290, %v313
        %v316 = vmul.f32 %v295, %v312
        %v317 = vmul.f32 %v295, %v313
        %v318 = vmul.f32 %v300, %v312
        %v319 = vmul.f32 %v300, %v313
        %v320 = vmul.f32 %v305, %v312
        %v321 = vmul.f32 %v305, %v313
        %322 = vset.pattern.permute.xlu0 1
        %323 = vperm.xlu0 %322, %v283
        %v324 = vpop.permute.xlu0 %323
        %326 = vset.pattern.permute.xlu0 1
        %327 = vperm.xlu0 %326, %v284
        %v328 = vpop.permute.xlu0 %327
        %330 = vset.pattern.permute.xlu0 1
        %331 = vperm.xlu0 %330, %v285
        %v332 = vpop.permute.xlu0 %331
        %334 = vset.pattern.permute.xlu0 1
        %335 = vperm.xlu0 %334, %v286
        %v336 = vpop.permute.xlu0 %335
        %v338 = vperm.slane %v282, 1
        %v339 = vperm.slane %v282, 3
        %v342 = vperm.slane %v338, 1
        %v343 = vperm.slane %v339, 1
        %v344 = vmul.f32 %v324, %v342
        %v345 = vmul.f32 %v324, %v343
        %v346 = vmul.f32 %v328, %v342
        %v347 = vmul.f32 %v328, %v343
        %v348 = vmul.f32 %v332, %v342
        %v349 = vmul.f32 %v332, %v343
        %v350 = vmul.f32 %v336, %v342
        %v351 = vmul.f32 %v336, %v343
        %v352 = vadd.f32 %v314, %v344
        %v353 = vadd.f32 %v315, %v345
        %v354 = vadd.f32 %v316, %v346
        %v355 = vadd.f32 %v317, %v347
        %v356 = vadd.f32 %v318, %v348
        %v357 = vadd.f32 %v319, %v349
        %v358 = vadd.f32 %v320, %v350
        %v359 = vadd.f32 %v321, %v351
        %v360 = vld [vmem:[%s2] sm:$0xff]
        %v361 = vld [vmem:[%s2 + $0x8] sm:$0xff]
        %v362 = vld [vmem:[%s2 + $0x10] sm:$0xff]
        %v363 = vld [vmem:[%s2 + $0x18] sm:$0xff]
        %365 = vset.pattern.permute.xlu0 0
        %366 = vperm.xlu0 %365, %v360
        %v367 = vpop.permute.xlu0 %366
        %370 = vset.pattern.permute.xlu0 0
        %371 = vperm.xlu0 %370, %v361
        %v372 = vpop.permute.xlu0 %371
        %375 = vset.pattern.permute.xlu0 0
        %376 = vperm.xlu0 %375, %v362
        %v377 = vpop.permute.xlu0 %376
        %380 = vset.pattern.permute.xlu0 0
        %381 = vperm.xlu0 %380, %v363
        %v382 = vpop.permute.xlu0 %381
        %v384 = vadd.f32 %v352, %v367
        %v385 = vadd.f32 %v353, %v367
        %v386 = vadd.f32 %v354, %v372
        %v387 = vadd.f32 %v355, %v372
        %v388 = vadd.f32 %v356, %v377
        %v389 = vadd.f32 %v357, %v377
        %v390 = vadd.f32 %v358, %v382
        %v391 = vadd.f32 %v359, %v382
        %v392 = vld [vmem:[%s3] sm:$0xff]
        %v393 = vld [vmem:[%s3 + $0x8] sm:$0xff]
        %v394 = vld [vmem:[%s3 + $0x10] sm:$0xff]
        %v395 = vld [vmem:[%s3 + $0x18] sm:$0xff]
        %v396 = vtanh.pop %v384
        %v397 = vtanh.pop %v385
        %v398 = vtanh.pop %v386
        %v399 = vtanh.pop %v387
        %v400 = vtanh.pop %v388
        %v401 = vtanh.pop %v389
        %v402 = vtanh.pop %v390
        %v403 = vtanh.pop %v391
        %v404 = vld [vmem:[%s4] sm:$0xff]
        %v405 = vld [vmem:[%s4 + $0x8] sm:$0xff]
        %v406 = vld [vmem:[%s4 + $0x10] sm:$0xff]
        %v407 = vld [vmem:[%s4 + $0x18] sm:$0xff]
        %409 = vset.pattern.permute.xlu0 0
        %410 = vperm.xlu0 %409, %v404
        %v411 = vpop.permute.xlu0 %410
        %414 = vset.pattern.permute.xlu0 0
        %415 = vperm.xlu0 %414, %v405
        %v416 = vpop.permute.xlu0 %415
        %419 = vset.pattern.permute.xlu0 0
        %420 = vperm.xlu0 %419, %v406
        %v421 = vpop.permute.xlu0 %420
        %424 = vset.pattern.permute.xlu0 0
        %425 = vperm.xlu0 %424, %v407
        %v426 = vpop.permute.xlu0 %425
        %vm428 = vcmask 261120
        %v430 = vsel %vm428, %v392, 0
        %v433 = vsel %vm428, %v393, 0
        %v436 = vsel %vm428, %v394, 0
        %v439 = vsel %vm428, %v395, 0
        %441 = vmatpush.msra.mxu0 0.0
        %442 = vmatpush.msra.mxu0 0.0
        %443 = vmatpush.msra.mxu0 0.0
        %444 = vmatpush.msra.mxu0 0.0
        %445 = vmatpush.msra.mxu0 0.0
        %446 = vmatpush.msra.mxu0 0.0
        %447 = vmatpush.msra.mxu0 0.0
        %448 = vmatpush.msra.mxu0 0.0
        %449 = vmatpush.msra.mxu0 0.0
        %450 = vmatpush.msra.mxu0 0.0
        %451 = vmatpush.msra.mxu0 0.0
        %452 = vmatpush.msra.mxu0 0.0
        %453 = vmatpush.msra.mxu0 %v402
        %454 = vmatpush.msra.mxu0 %v400
        %455 = vmatpush.msra.mxu0 %v398
        %456 = vmatpush.msra.mxu0 %v396
        %457 = vmatmul.f32.gmra.mxu0 %v430
        %v458 = vpop.f32.mrf.mxu0
        %v459 = vadd.f32 %v411, %v458
        %460 = vmatmul.f32.gmra.mxu0 %v433
        %v461 = vpop.f32.mrf.mxu0
        %v462 = vadd.f32 %v416, %v461
        %463 = vmatmul.f32.gmra.mxu0 %v436
        %v464 = vpop.f32.mrf.mxu0
        %v465 = vadd.f32 %v421, %v464
        %466 = vmatmul.f32.gmra.mxu0 %v439
        %v467 = vpop.f32.mrf.mxu0
        %v468 = vadd.f32 %v426, %v467
        %469 = vdwg.mxu0
        %470 = vmatpush.msra.mxu0 0.0
        %471 = vmatpush.msra.mxu0 0.0
        %472 = vmatpush.msra.mxu0 0.0
        %473 = vmatpush.msra.mxu0 0.0
        %474 = vmatpush.msra.mxu0 0.0
        %475 = vmatpush.msra.mxu0 0.0
        %476 = vmatpush.msra.mxu0 0.0
        %477 = vmatpush.msra.mxu0 0.0
        %478 = vmatpush.msra.mxu0 0.0
        %479 = vmatpush.msra.mxu0 0.0
        %480 = vmatpush.msra.mxu0 0.0
        %481 = vmatpush.msra.mxu0 0.0
        %482 = vmatpush.msra.mxu0 %v403
        %483 = vmatpush.msra.mxu0 %v401
        %484 = vmatpush.msra.mxu0 %v399
        %485 = vmatpush.msra.mxu0 %v397
        %486 = vmatmul.f32.gmra.mxu0 %v430
        %v487 = vpop.f32.mrf.mxu0
        %v488 = vadd.f32 %v411, %v487
        %489 = vmatmul.f32.gmra.mxu0 %v433
        %v490 = vpop.f32.mrf.mxu0
        %v491 = vadd.f32 %v416, %v490
        %492 = vmatmul.f32.gmra.mxu0 %v436
        %v493 = vpop.f32.mrf.mxu0
        %v494 = vadd.f32 %v421, %v493
        %495 = vmatmul.f32.gmra.mxu0 %v439
        %v496 = vpop.f32.mrf.mxu0
        %v497 = vadd.f32 %v426, %v496
        %498 = vdwg.mxu0
        %s499 = scalar_lea.vmem %s3, 32
        %v500 = vld [vmem:[%s499] sm:$0xff]
        %v501 = vld [vmem:[%s499 + $0x8] sm:$0xff]
        %v502 = vld [vmem:[%s499 + $0x10] sm:$0xff]
        %v503 = vld [vmem:[%s499 + $0x18] sm:$0xff]
        %v504 = vtanh.pop %v459
        %v505 = vtanh.pop %v488
        %v506 = vtanh.pop %v462
        %v507 = vtanh.pop %v491
        %v508 = vtanh.pop %v465
        %v509 = vtanh.pop %v494
        %v510 = vtanh.pop %v468
        %v511 = vtanh.pop %v497
        %s512 = scalar_lea.vmem %s4, 32
        %v513 = vld [vmem:[%s512] sm:$0xff]
        %v514 = vld [vmem:[%s512 + $0x8] sm:$0xff]
        %v515 = vld [vmem:[%s512 + $0x10] sm:$0xff]
        %v516 = vld [vmem:[%s512 + $0x18] sm:$0xff]
        %518 = vset.pattern.permute.xlu0 0
        %519 = vperm.xlu0 %518, %v513
        %v520 = vpop.permute.xlu0 %519
        %523 = vset.pattern.permute.xlu0 0
        %524 = vperm.xlu0 %523, %v514
        %v525 = vpop.permute.xlu0 %524
        %528 = vset.pattern.permute.xlu0 0
        %529 = vperm.xlu0 %528, %v515
        %v530 = vpop.permute.xlu0 %529
        %533 = vset.pattern.permute.xlu0 0
        %534 = vperm.xlu0 %533, %v516
        %v535 = vpop.permute.xlu0 %534
        %v538 = vsel %vm428, %v500, 0
        %v541 = vsel %vm428, %v501, 0
        %v544 = vsel %vm428, %v502, 0
        %v547 = vsel %vm428, %v503, 0
        %549 = vmatpush.msra.mxu0 0.0
        %550 = vmatpush.msra.mxu0 0.0
        %551 = vmatpush.msra.mxu0 0.0
        %552 = vmatpush.msra.mxu0 0.0
        %553 = vmatpush.msra.mxu0 0.0
        %554 = vmatpush.msra.mxu0 0.0
        %555 = vmatpush.msra.mxu0 0.0
        %556 = vmatpush.msra.mxu0 0.0
        %557 = vmatpush.msra.mxu0 0.0
        %558 = vmatpush.msra.mxu0 0.0
        %559 = vmatpush.msra.mxu0 0.0
        %560 = vmatpush.msra.mxu0 0.0
        %561 = vmatpush.msra.mxu0 %v510
        %562 = vmatpush.msra.mxu0 %v508
        %563 = vmatpush.msra.mxu0 %v506
        %564 = vmatpush.msra.mxu0 %v504
        %565 = vmatmul.f32.gmra.mxu0 %v538
        %v566 = vpop.f32.mrf.mxu0
        %v567 = vadd.f32 %v520, %v566
        %568 = vmatmul.f32.gmra.mxu0 %v541
        %v569 = vpop.f32.mrf.mxu0
        %v570 = vadd.f32 %v525, %v569
        %571 = vmatmul.f32.gmra.mxu0 %v544
        %v572 = vpop.f32.mrf.mxu0
        %v573 = vadd.f32 %v530, %v572
        %574 = vmatmul.f32.gmra.mxu0 %v547
        %v575 = vpop.f32.mrf.mxu0
        %v576 = vadd.f32 %v535, %v575
        %577 = vdwg.mxu0
        %578 = vmatpush.msra.mxu0 0.0
        %579 = vmatpush.msra.mxu0 0.0
        %580 = vmatpush.msra.mxu0 0.0
        %581 = vmatpush.msra.mxu0 0.0
        %582 = vmatpush.msra.mxu0 0.0
        %583 = vmatpush.msra.mxu0 0.0
        %584 = vmatpush.msra.mxu0 0.0
        %585 = vmatpush.msra.mxu0 0.0
        %586 = vmatpush.msra.mxu0 0.0
        %587 = vmatpush.msra.mxu0 0.0
        %588 = vmatpush.msra.mxu0 0.0
        %589 = vmatpush.msra.mxu0 0.0
        %590 = vmatpush.msra.mxu0 %v511
        %591 = vmatpush.msra.mxu0 %v509
        %592 = vmatpush.msra.mxu0 %v507
        %593 = vmatpush.msra.mxu0 %v505
        %594 = vmatmul.f32.gmra.mxu0 %v538
        %v595 = vpop.f32.mrf.mxu0
        %v596 = vadd.f32 %v520, %v595
        %597 = vmatmul.f32.gmra.mxu0 %v541
        %v598 = vpop.f32.mrf.mxu0
        %v599 = vadd.f32 %v525, %v598
        %600 = vmatmul.f32.gmra.mxu0 %v544
        %v601 = vpop.f32.mrf.mxu0
        %v602 = vadd.f32 %v530, %v601
        %603 = vmatmul.f32.gmra.mxu0 %v547
        %v604 = vpop.f32.mrf.mxu0
        %v605 = vadd.f32 %v535, %v604
        %606 = vdwg.mxu0
        %s607 = scalar_lea.vmem %s3, 64
        %v608 = vld [vmem:[%s607] sm:$0xff]
        %v609 = vld [vmem:[%s607 + $0x8] sm:$0xff]
        %v610 = vld [vmem:[%s607 + $0x10] sm:$0xff]
        %v611 = vld [vmem:[%s607 + $0x18] sm:$0xff]
        %v612 = vtanh.pop %v567
        %v613 = vtanh.pop %v596
        %v614 = vtanh.pop %v570
        %v615 = vtanh.pop %v599
        %v616 = vtanh.pop %v573
        %v617 = vtanh.pop %v602
        %v618 = vtanh.pop %v576
        %v619 = vtanh.pop %v605
        %s620 = scalar_lea.vmem %s4, 64
        %v621 = vld [vmem:[%s620] sm:$0xff]
        %v622 = vld [vmem:[%s620 + $0x8] sm:$0xff]
        %v623 = vld [vmem:[%s620 + $0x10] sm:$0xff]
        %v624 = vld [vmem:[%s620 + $0x18] sm:$0xff]
        %626 = vset.pattern.permute.xlu0 0
        %627 = vperm.xlu0 %626, %v621
        %v628 = vpop.permute.xlu0 %627
        %631 = vset.pattern.permute.xlu0 0
        %632 = vperm.xlu0 %631, %v622
        %v633 = vpop.permute.xlu0 %632
        %636 = vset.pattern.permute.xlu0 0
        %637 = vperm.xlu0 %636, %v623
        %v638 = vpop.permute.xlu0 %637
        %641 = vset.pattern.permute.xlu0 0
        %642 = vperm.xlu0 %641, %v624
        %v643 = vpop.permute.xlu0 %642
        %v646 = vsel %vm428, %v608, 0
        %v649 = vsel %vm428, %v609, 0
        %v652 = vsel %vm428, %v610, 0
        %v655 = vsel %vm428, %v611, 0
        %657 = vmatpush.msra.mxu0 0.0
        %658 = vmatpush.msra.mxu0 0.0
        %659 = vmatpush.msra.mxu0 0.0
        %660 = vmatpush.msra.mxu0 0.0
        %661 = vmatpush.msra.mxu0 0.0
        %662 = vmatpush.msra.mxu0 0.0
        %663 = vmatpush.msra.mxu0 0.0
        %664 = vmatpush.msra.mxu0 0.0
        %665 = vmatpush.msra.mxu0 0.0
        %666 = vmatpush.msra.mxu0 0.0
        %667 = vmatpush.msra.mxu0 0.0
        %668 = vmatpush.msra.mxu0 0.0
        %669 = vmatpush.msra.mxu0 %v618
        %670 = vmatpush.msra.mxu0 %v616
        %671 = vmatpush.msra.mxu0 %v614
        %672 = vmatpush.msra.mxu0 %v612
        %673 = vmatmul.f32.gmra.mxu0 %v646
        %v674 = vpop.f32.mrf.mxu0
        %v675 = vadd.f32 %v628, %v674
        %676 = vmatmul.f32.gmra.mxu0 %v649
        %v677 = vpop.f32.mrf.mxu0
        %v678 = vadd.f32 %v633, %v677
        %679 = vmatmul.f32.gmra.mxu0 %v652
        %v680 = vpop.f32.mrf.mxu0
        %v681 = vadd.f32 %v638, %v680
        %682 = vmatmul.f32.gmra.mxu0 %v655
        %v683 = vpop.f32.mrf.mxu0
        %v684 = vadd.f32 %v643, %v683
        %685 = vdwg.mxu0
        %686 = vmatpush.msra.mxu0 0.0
        %687 = vmatpush.msra.mxu0 0.0
        %688 = vmatpush.msra.mxu0 0.0
        %689 = vmatpush.msra.mxu0 0.0
        %690 = vmatpush.msra.mxu0 0.0
        %691 = vmatpush.msra.mxu0 0.0
        %692 = vmatpush.msra.mxu0 0.0
        %693 = vmatpush.msra.mxu0 0.0
        %694 = vmatpush.msra.mxu0 0.0
        %695 = vmatpush.msra.mxu0 0.0
        %696 = vmatpush.msra.mxu0 0.0
        %697 = vmatpush.msra.mxu0 0.0
        %698 = vmatpush.msra.mxu0 %v619
        %699 = vmatpush.msra.mxu0 %v617
        %700 = vmatpush.msra.mxu0 %v615
        %701 = vmatpush.msra.mxu0 %v613
        %702 = vmatmul.f32.gmra.mxu0 %v646
        %v703 = vpop.f32.mrf.mxu0
        %v704 = vadd.f32 %v628, %v703
        %705 = vmatmul.f32.gmra.mxu0 %v649
        %v706 = vpop.f32.mrf.mxu0
        %v707 = vadd.f32 %v633, %v706
        %708 = vmatmul.f32.gmra.mxu0 %v652
        %v709 = vpop.f32.mrf.mxu0
        %v710 = vadd.f32 %v638, %v709
        %711 = vmatmul.f32.gmra.mxu0 %v655
        %v712 = vpop.f32.mrf.mxu0
        %v713 = vadd.f32 %v643, %v712
        %714 = vdwg.mxu0
        %s715 = scalar_lea.vmem %s3, 96
        %v716 = vld [vmem:[%s715] sm:$0xff]
        %v717 = vld [vmem:[%s715 + $0x8] sm:$0xff]
        %v718 = vld [vmem:[%s715 + $0x10] sm:$0xff]
        %v719 = vld [vmem:[%s715 + $0x18] sm:$0xff]
        %v720 = vtanh.pop %v675
        %v721 = vtanh.pop %v704
        %v722 = vtanh.pop %v678
        %v723 = vtanh.pop %v707
        %v724 = vtanh.pop %v681
        %v725 = vtanh.pop %v710
        %v726 = vtanh.pop %v684
        %v727 = vtanh.pop %v713
        %s728 = scalar_lea.vmem %s4, 96
        %v729 = vld [vmem:[%s728] sm:$0xff]
        %v730 = vld [vmem:[%s728 + $0x8] sm:$0xff]
        %v731 = vld [vmem:[%s728 + $0x10] sm:$0xff]
        %v732 = vld [vmem:[%s728 + $0x18] sm:$0xff]
        %734 = vset.pattern.permute.xlu0 0
        %735 = vperm.xlu0 %734, %v729
        %v736 = vpop.permute.xlu0 %735
        %739 = vset.pattern.permute.xlu0 0
        %740 = vperm.xlu0 %739, %v730
        %v741 = vpop.permute.xlu0 %740
        %744 = vset.pattern.permute.xlu0 0
        %745 = vperm.xlu0 %744, %v731
        %v746 = vpop.permute.xlu0 %745
        %749 = vset.pattern.permute.xlu0 0
        %750 = vperm.xlu0 %749, %v732
        %v751 = vpop.permute.xlu0 %750
        %v754 = vsel %vm428, %v716, 0
        %v757 = vsel %vm428, %v717, 0
        %v760 = vsel %vm428, %v718, 0
        %v763 = vsel %vm428, %v719, 0
        %765 = vmatpush.msra.mxu0 0.0
        %766 = vmatpush.msra.mxu0 0.0
        %767 = vmatpush.msra.mxu0 0.0
        %768 = vmatpush.msra.mxu0 0.0
        %769 = vmatpush.msra.mxu0 0.0
        %770 = vmatpush.msra.mxu0 0.0
        %771 = vmatpush.msra.mxu0 0.0
        %772 = vmatpush.msra.mxu0 0.0
        %773 = vmatpush.msra.mxu0 0.0
        %774 = vmatpush.msra.mxu0 0.0
        %775 = vmatpush.msra.mxu0 0.0
        %776 = vmatpush.msra.mxu0 0.0
        %777 = vmatpush.msra.mxu0 %v726
        %778 = vmatpush.msra.mxu0 %v724
        %779 = vmatpush.msra.mxu0 %v722
        %780 = vmatpush.msra.mxu0 %v720
        %781 = vmatmul.f32.gmra.mxu0 %v754
        %v782 = vpop.f32.mrf.mxu0
        %v783 = vadd.f32 %v736, %v782
        %784 = vmatmul.f32.gmra.mxu0 %v757
        %v785 = vpop.f32.mrf.mxu0
        %v786 = vadd.f32 %v741, %v785
        %787 = vmatmul.f32.gmra.mxu0 %v760
        %v788 = vpop.f32.mrf.mxu0
        %v789 = vadd.f32 %v746, %v788
        %790 = vmatmul.f32.gmra.mxu0 %v763
        %v791 = vpop.f32.mrf.mxu0
        %v792 = vadd.f32 %v751, %v791
        %793 = vdwg.mxu0
        %794 = vmatpush.msra.mxu0 0.0
        %795 = vmatpush.msra.mxu0 0.0
        %796 = vmatpush.msra.mxu0 0.0
        %797 = vmatpush.msra.mxu0 0.0
        %798 = vmatpush.msra.mxu0 0.0
        %799 = vmatpush.msra.mxu0 0.0
        %800 = vmatpush.msra.mxu0 0.0
        %801 = vmatpush.msra.mxu0 0.0
        %802 = vmatpush.msra.mxu0 0.0
        %803 = vmatpush.msra.mxu0 0.0
        %804 = vmatpush.msra.mxu0 0.0
        %805 = vmatpush.msra.mxu0 0.0
        %806 = vmatpush.msra.mxu0 %v727
        %807 = vmatpush.msra.mxu0 %v725
        %808 = vmatpush.msra.mxu0 %v723
        %809 = vmatpush.msra.mxu0 %v721
        %810 = vmatmul.f32.gmra.mxu0 %v754
        %v811 = vpop.f32.mrf.mxu0
        %v812 = vadd.f32 %v736, %v811
        %813 = vmatmul.f32.gmra.mxu0 %v757
        %v814 = vpop.f32.mrf.mxu0
        %v815 = vadd.f32 %v741, %v814
        %816 = vmatmul.f32.gmra.mxu0 %v760
        %v817 = vpop.f32.mrf.mxu0
        %v818 = vadd.f32 %v746, %v817
        %819 = vmatmul.f32.gmra.mxu0 %v763
        %v820 = vpop.f32.mrf.mxu0
        %v821 = vadd.f32 %v751, %v820
        %822 = vdwg.mxu0
        %s823 = scalar_lea.vmem %s3, 128
        %v824 = vld [vmem:[%s823] sm:$0xff]
        %v825 = vld [vmem:[%s823 + $0x8] sm:$0xff]
        %v826 = vld [vmem:[%s823 + $0x10] sm:$0xff]
        %v827 = vld [vmem:[%s823 + $0x18] sm:$0xff]
        %v828 = vtanh.pop %v783
        %v829 = vtanh.pop %v812
        %v830 = vtanh.pop %v786
        %v831 = vtanh.pop %v815
        %v832 = vtanh.pop %v789
        %v833 = vtanh.pop %v818
        %v834 = vtanh.pop %v792
        %v835 = vtanh.pop %v821
        %s836 = scalar_lea.vmem %s4, 128
        %v837 = vld [vmem:[%s836] sm:$0xff]
        %v838 = vld [vmem:[%s836 + $0x8] sm:$0xff]
        %v839 = vld [vmem:[%s836 + $0x10] sm:$0xff]
        %v840 = vld [vmem:[%s836 + $0x18] sm:$0xff]
        %842 = vset.pattern.permute.xlu0 0
        %843 = vperm.xlu0 %842, %v837
        %v844 = vpop.permute.xlu0 %843
        %847 = vset.pattern.permute.xlu0 0
        %848 = vperm.xlu0 %847, %v838
        %v849 = vpop.permute.xlu0 %848
        %852 = vset.pattern.permute.xlu0 0
        %853 = vperm.xlu0 %852, %v839
        %v854 = vpop.permute.xlu0 %853
        %857 = vset.pattern.permute.xlu0 0
        %858 = vperm.xlu0 %857, %v840
        %v859 = vpop.permute.xlu0 %858
        %v862 = vsel %vm428, %v824, 0
        %v865 = vsel %vm428, %v825, 0
        %v868 = vsel %vm428, %v826, 0
        %v871 = vsel %vm428, %v827, 0
        %873 = vmatpush.msra.mxu0 0.0
        %874 = vmatpush.msra.mxu0 0.0
        %875 = vmatpush.msra.mxu0 0.0
        %876 = vmatpush.msra.mxu0 0.0
        %877 = vmatpush.msra.mxu0 0.0
        %878 = vmatpush.msra.mxu0 0.0
        %879 = vmatpush.msra.mxu0 0.0
        %880 = vmatpush.msra.mxu0 0.0
        %881 = vmatpush.msra.mxu0 0.0
        %882 = vmatpush.msra.mxu0 0.0
        %883 = vmatpush.msra.mxu0 0.0
        %884 = vmatpush.msra.mxu0 0.0
        %885 = vmatpush.msra.mxu0 %v834
        %886 = vmatpush.msra.mxu0 %v832
        %887 = vmatpush.msra.mxu0 %v830
        %888 = vmatpush.msra.mxu0 %v828
        %889 = vmatmul.f32.gmra.mxu0 %v862
        %v890 = vpop.f32.mrf.mxu0
        %v891 = vadd.f32 %v844, %v890
        %892 = vmatmul.f32.gmra.mxu0 %v865
        %v893 = vpop.f32.mrf.mxu0
        %v894 = vadd.f32 %v849, %v893
        %895 = vmatmul.f32.gmra.mxu0 %v868
        %v896 = vpop.f32.mrf.mxu0
        %v897 = vadd.f32 %v854, %v896
        %898 = vmatmul.f32.gmra.mxu0 %v871
        %v899 = vpop.f32.mrf.mxu0
        %v900 = vadd.f32 %v859, %v899
        %901 = vdwg.mxu0
        %902 = vmatpush.msra.mxu0 0.0
        %903 = vmatpush.msra.mxu0 0.0
        %904 = vmatpush.msra.mxu0 0.0
        %905 = vmatpush.msra.mxu0 0.0
        %906 = vmatpush.msra.mxu0 0.0
        %907 = vmatpush.msra.mxu0 0.0
        %908 = vmatpush.msra.mxu0 0.0
        %909 = vmatpush.msra.mxu0 0.0
        %910 = vmatpush.msra.mxu0 0.0
        %911 = vmatpush.msra.mxu0 0.0
        %912 = vmatpush.msra.mxu0 0.0
        %913 = vmatpush.msra.mxu0 0.0
        %914 = vmatpush.msra.mxu0 %v835
        %915 = vmatpush.msra.mxu0 %v833
        %916 = vmatpush.msra.mxu0 %v831
        %917 = vmatpush.msra.mxu0 %v829
        %918 = vmatmul.f32.gmra.mxu0 %v862
        %v919 = vpop.f32.mrf.mxu0
        %v920 = vadd.f32 %v844, %v919
        %921 = vmatmul.f32.gmra.mxu0 %v865
        %v922 = vpop.f32.mrf.mxu0
        %v923 = vadd.f32 %v849, %v922
        %924 = vmatmul.f32.gmra.mxu0 %v868
        %v925 = vpop.f32.mrf.mxu0
        %v926 = vadd.f32 %v854, %v925
        %927 = vmatmul.f32.gmra.mxu0 %v871
        %v928 = vpop.f32.mrf.mxu0
        %v929 = vadd.f32 %v859, %v928
        %930 = vdwg.mxu0
        %s931 = scalar_lea.vmem %s3, 160
        %v932 = vld [vmem:[%s931] sm:$0xff]
        %v933 = vld [vmem:[%s931 + $0x8] sm:$0xff]
        %v934 = vld [vmem:[%s931 + $0x10] sm:$0xff]
        %v935 = vld [vmem:[%s931 + $0x18] sm:$0xff]
        %v936 = vtanh.pop %v891
        %v937 = vtanh.pop %v920
        %v938 = vtanh.pop %v894
        %v939 = vtanh.pop %v923
        %v940 = vtanh.pop %v897
        %v941 = vtanh.pop %v926
        %v942 = vtanh.pop %v900
        %v943 = vtanh.pop %v929
        %s944 = scalar_lea.vmem %s4, 160
        %v945 = vld [vmem:[%s944] sm:$0xff]
        %v946 = vld [vmem:[%s944 + $0x8] sm:$0xff]
        %v947 = vld [vmem:[%s944 + $0x10] sm:$0xff]
        %v948 = vld [vmem:[%s944 + $0x18] sm:$0xff]
        %950 = vset.pattern.permute.xlu0 0
        %951 = vperm.xlu0 %950, %v945
        %v952 = vpop.permute.xlu0 %951
        %955 = vset.pattern.permute.xlu0 0
        %956 = vperm.xlu0 %955, %v946
        %v957 = vpop.permute.xlu0 %956
        %960 = vset.pattern.permute.xlu0 0
        %961 = vperm.xlu0 %960, %v947
        %v962 = vpop.permute.xlu0 %961
        %965 = vset.pattern.permute.xlu0 0
        %966 = vperm.xlu0 %965, %v948
        %v967 = vpop.permute.xlu0 %966
        %v970 = vsel %vm428, %v932, 0
        %v973 = vsel %vm428, %v933, 0
        %v976 = vsel %vm428, %v934, 0
        %v979 = vsel %vm428, %v935, 0
        %981 = vmatpush.msra.mxu0 0.0
        %982 = vmatpush.msra.mxu0 0.0
        %983 = vmatpush.msra.mxu0 0.0
        %984 = vmatpush.msra.mxu0 0.0
        %985 = vmatpush.msra.mxu0 0.0
        %986 = vmatpush.msra.mxu0 0.0
        %987 = vmatpush.msra.mxu0 0.0
        %988 = vmatpush.msra.mxu0 0.0
        %989 = vmatpush.msra.mxu0 0.0
        %990 = vmatpush.msra.mxu0 0.0
        %991 = vmatpush.msra.mxu0 0.0
        %992 = vmatpush.msra.mxu0 0.0
        %993 = vmatpush.msra.mxu0 %v942
        %994 = vmatpush.msra.mxu0 %v940
        %995 = vmatpush.msra.mxu0 %v938
        %996 = vmatpush.msra.mxu0 %v936
        %997 = vmatmul.f32.gmra.mxu0 %v970
        %v998 = vpop.f32.mrf.mxu0
        %v999 = vadd.f32 %v952, %v998
        %1000 = vmatmul.f32.gmra.mxu0 %v973
        %v1001 = vpop.f32.mrf.mxu0
        %v1002 = vadd.f32 %v957, %v1001
        %1003 = vmatmul.f32.gmra.mxu0 %v976
        %v1004 = vpop.f32.mrf.mxu0
        %v1005 = vadd.f32 %v962, %v1004
        %1006 = vmatmul.f32.gmra.mxu0 %v979
        %v1007 = vpop.f32.mrf.mxu0
        %v1008 = vadd.f32 %v967, %v1007
        %1009 = vdwg.mxu0
        %1010 = vmatpush.msra.mxu0 0.0
        %1011 = vmatpush.msra.mxu0 0.0
        %1012 = vmatpush.msra.mxu0 0.0
        %1013 = vmatpush.msra.mxu0 0.0
        %1014 = vmatpush.msra.mxu0 0.0
        %1015 = vmatpush.msra.mxu0 0.0
        %1016 = vmatpush.msra.mxu0 0.0
        %1017 = vmatpush.msra.mxu0 0.0
        %1018 = vmatpush.msra.mxu0 0.0
        %1019 = vmatpush.msra.mxu0 0.0
        %1020 = vmatpush.msra.mxu0 0.0
        %1021 = vmatpush.msra.mxu0 0.0
        %1022 = vmatpush.msra.mxu0 %v943
        %1023 = vmatpush.msra.mxu0 %v941
        %1024 = vmatpush.msra.mxu0 %v939
        %1025 = vmatpush.msra.mxu0 %v937
        %1026 = vmatmul.f32.gmra.mxu0 %v970
        %v1027 = vpop.f32.mrf.mxu0
        %v1028 = vadd.f32 %v952, %v1027
        %1029 = vmatmul.f32.gmra.mxu0 %v973
        %v1030 = vpop.f32.mrf.mxu0
        %v1031 = vadd.f32 %v957, %v1030
        %1032 = vmatmul.f32.gmra.mxu0 %v976
        %v1033 = vpop.f32.mrf.mxu0
        %v1034 = vadd.f32 %v962, %v1033
        %1035 = vmatmul.f32.gmra.mxu0 %v979
        %v1036 = vpop.f32.mrf.mxu0
        %v1037 = vadd.f32 %v967, %v1036
        %1038 = vdwg.mxu0
        %v1039 = vld [vmem:[%s5] sm:$0x1]
        %v1040 = vld [vmem:[#allocation2] sm:$0x1]
        %1042 = vset.pattern.permute.xlu0 0
        %1043 = vperm.xlu0 %1042, %v1040
        %v1044 = vpop.permute.xlu0 %1043
        %v1046 = vperm.slane %v1044, 0
        %v1048 = vsel %vm428, %v1039, 0
        %1050 = vmatpush.msra.mxu0 0.0
        %1051 = vmatpush.msra.mxu0 0.0
        %1052 = vmatpush.msra.mxu0 0.0
        %1053 = vmatpush.msra.mxu0 0.0
        %1054 = vmatpush.msra.mxu0 0.0
        %1055 = vmatpush.msra.mxu0 0.0
        %1056 = vmatpush.msra.mxu0 0.0
        %1057 = vmatpush.msra.mxu0 0.0
        %1058 = vmatpush.msra.mxu0 0.0
        %1059 = vmatpush.msra.mxu0 0.0
        %1060 = vmatpush.msra.mxu0 0.0
        %1061 = vmatpush.msra.mxu0 0.0
        %1062 = vmatpush.msra.mxu0 %v1008
        %1063 = vmatpush.msra.mxu0 %v1005
        %1064 = vmatpush.msra.mxu0 %v1002
        %1065 = vmatpush.msra.mxu0 %v999
        %1066 = vmatmul.f32.gmra.mxu0 %v1048
        %v1067 = vpop.f32.mrf.mxu0
        %v1068 = vadd.f32 %v1046, %v1067
        %1069 = vdwg.mxu0
        %1070 = vmatpush.msra.mxu0 0.0
        %1071 = vmatpush.msra.mxu0 0.0
        %1072 = vmatpush.msra.mxu0 0.0
        %1073 = vmatpush.msra.mxu0 0.0
        %1074 = vmatpush.msra.mxu0 0.0
        %1075 = vmatpush.msra.mxu0 0.0
        %1076 = vmatpush.msra.mxu0 0.0
        %1077 = vmatpush.msra.mxu0 0.0
        %1078 = vmatpush.msra.mxu0 0.0
        %1079 = vmatpush.msra.mxu0 0.0
        %1080 = vmatpush.msra.mxu0 0.0
        %1081 = vmatpush.msra.mxu0 0.0
        %1082 = vmatpush.msra.mxu0 %v1037
        %1083 = vmatpush.msra.mxu0 %v1034
        %1084 = vmatpush.msra.mxu0 %v1031
        %1085 = vmatpush.msra.mxu0 %v1028
        %1086 = vmatmul.f32.gmra.mxu0 %v1048
        %v1087 = vpop.f32.mrf.mxu0
        %v1088 = vadd.f32 %v1046, %v1087
        %1089 = vdwg.mxu0
        %v1092 = vrot.slane %v1088, 7
        %vm1093 = vcmask 1040384
        %v1094 = vsel %vm1093, %v1068, %v1092
        %v1096 = vlaneseq
        %vm1097 = vcmp.ge.s32.totalorder %v1096, 0
        %vm1098 = vcmp.lt.s32.totalorder %v1096, 256
        %vm1099 = vmand %vm1097, %vm1098
        %1100 = vst.msk [vmem:[%s274] sm:$0x3] %vm1099, %v1094
        %s1101 = sand.u32 %s183, 1
        %s1102 = scalar_lea.sflag [#allocation4], %s1101
        %s1103 = sand.u32 %s183, 1
        %s1104 = smul.addr %s1103, 2
        %s1105 = scalar_lea.vmem [#allocation3], %s1104
        // Predicated region
        $region49: #{tpu_custom_call.1} parent=47 // pred_check
          %p1106 = pneg %p193
        $region50: #{tpu_custom_call.1} parent=47 // pred_check_branch
          %1108 = sbr.rel (%p1106) target = $region52
        $region51: #{tpu_custom_call.1} parent=47 // pred_region
          %s1109 = smul.u32 2, %s23
          %1111 = vsyncadd %s1102, 0
          %s1112 = scalar_lea.hbm %s7, %s1109
          %s1114 = sshll.u32 %s1105, 4
          %s1115 = int_to_ptr.vmem [resolvable:$true] %s1114
          %s1116 = sshll.u32 %s1112, 4
          %s1117 = int_to_ptr.hbm [resolvable:$true] %s1116
          %1119 = dma.vmem_to_hbm [thread:$0]  %s1115, 32, %s1117, %s1102
        $region52: #{tpu_custom_call.1} parent=47 // pred_fallthru
          _
      $region48: #{tpu_custom_call.1} parent=5 // pred_fallthru
        _
      %p1120 = scmp.le.s32.totalorder 2, %s18
      // Predicated region
      $region53: #{tpu_custom_call.1} parent=5 // pred_check
        %p1121 = pneg %p1120
      $region54: #{tpu_custom_call.1} parent=5 // pred_check_branch
        %1123 = sbr.rel (%p1121) target = $region56
      $region55: #{tpu_custom_call.1} parent=5 // pred_region
        %s1124 = ssub.s32 %s18, 2
        // Predicated region
        $region57: #{tpu_custom_call.1} parent=55 // pred_check
          %p1125 = pneg %p199
        $region58: #{tpu_custom_call.1} parent=55 // pred_check_branch
          %1127 = sbr.rel (%p1125) target = $region60
        $region59: #{tpu_custom_call.1} parent=55 // pred_region
          %s1128 = sand.u32 %s184, 1
          %s1129 = scalar_lea.sflag [#allocation4], %s1128
          %s1130 = sand.u32 %s184, 1
          %s1131 = smul.addr %s1130, 2
          %s1132 = scalar_lea.vmem [#allocation3], %s1131
          %1134 = dma.done %s1129, 32
        $region60: #{tpu_custom_call.1} parent=55 // pred_fallthru
          _
      $region56: #{tpu_custom_call.1} parent=5 // pred_fallthru
        _
    $region6: #{tpu_custom_call.1} parent=1 // loop_footer
      %s22 = sadd.s32 1, %s18
    $region7: #{tpu_custom_call.1} parent=1 // loop_footer_branch
      %17 = sbr.rel target = $region3
    $region8: #{tpu_custom_call.1} parent=1 // loop_exit
      _
    %1135 = vsyncpa [#allocation4], 1
    %s1136 = scalar_lea.sflag [#allocation4], 1
    %1137 = vsyncpa %s1136, 1

</llo_original>
